<compile_context>
chip_gen: v5e
topology: v5e:2x2
jax: 0.10.0
libtpu: 0.0.40
codegen_flags: <defaults>
</compile_context>

<pallas_src>
import jax
import jax.numpy as jnp
from jax.experimental import pallas as pl
from jax.experimental.pallas import tpu as pltpu


def value_network_kernel(x_ref, w1_ref, b1_ref, w2_ref, b2_ref, o_ref):
    w1 = w1_ref[...]
    w2 = w2_ref[...]
    # Hidden layer: x @ W1 (MXU, f32 accumulate), bias + ReLU in f32 on the VPU.
    h = jnp.dot(x_ref[...].astype(w1.dtype), w1,
                preferred_element_type=jnp.float32)
    h = jnp.maximum(h + b1_ref[...], 0.0)           # (TB, H) + (1, H) broadcast
    # Output layer: h @ W2 (MXU, f32 accumulate), bias in f32.
    out = jnp.dot(h.astype(w2.dtype), w2,
                  preferred_element_type=jnp.float32)
    out = out + b2_ref[...]                         # (TB, A_pad) + (1, A_pad)
    o_ref[...] = out.astype(o_ref.dtype)


def value_network_forward(state, w1, b1, w2, b2, *,
                          block_b=1024, matmul_dtype=None):
    """Forward pass of ValueNetwork.

    state: (B, S) f32; w1: (S, H); b1: (H,); w2: (H, A); b2: (A,).
    block_b:      batch tile size (rows per grid step).
    matmul_dtype: optional dtype (e.g. jnp.bfloat16) for the MXU operands;
                  accumulation, bias-add and ReLU always stay in f32.
    """
    B, S = state.shape
    H = w1.shape[1]
    A = w2.shape[1]
    out_dtype = state.dtype

    # ---- lane-dense output: pad action dim up to a multiple of 128 ----------
    A_pad = pl.cdiv(A, 128) * 128
    if A_pad != A:
        w2 = jnp.pad(w2, ((0, 0), (0, A_pad - A)))   # zero columns
        b2 = jnp.pad(b2, (0, A_pad - A))             # zero bias entries

    if matmul_dtype is not None:
        w1 = w1.astype(matmul_dtype)
        w2 = w2.astype(matmul_dtype)

    # Biases as (1, N) f32 rows so they broadcast over the batch tile.
    b1_2d = b1.reshape(1, H).astype(jnp.float32)
    b2_2d = b2.reshape(1, A_pad).astype(jnp.float32)

    # ---- batch tiling --------------------------------------------------------
    # Small batch: single full-array block (block dims == array dims is always
    # layout-legal). Large batch: multiple-of-8 tile, pad batch so grid divides
    # evenly. VMEM budget per step at TB=1024: 2*(1024*S*4) + 2*(1024*A_pad*4)
    # + weights  ~= 1.2 MiB for typical DQN sizes -> comfortably under the
    # 32 MiB default scoped limit and v7x's 64 MiB physical VMEM.
    if B <= block_b:
        tb = B
        b_pad = B
    else:
        tb = max(8, (block_b // 8) * 8)
        b_pad = pl.cdiv(B, tb) * tb
    if b_pad != B:
        state = jnp.pad(state, ((0, b_pad - B), (0, 0)))

    grid = (b_pad // tb,)

    out = pl.pallas_call(
        value_network_kernel,
        out_shape=jax.ShapeDtypeStruct((b_pad, A_pad), out_dtype),
        grid=grid,
        in_specs=[
            pl.BlockSpec((tb, S), lambda i: (i, 0)),      # x: tiled over batch
            pl.BlockSpec((S, H), lambda i: (0, 0)),       # W1: resident
            pl.BlockSpec((1, H), lambda i: (0, 0)),       # b1: resident
            pl.BlockSpec((H, A_pad), lambda i: (0, 0)),   # W2: resident
            pl.BlockSpec((1, A_pad), lambda i: (0, 0)),   # b2: resident
        ],
        out_specs=pl.BlockSpec((tb, A_pad), lambda i: (i, 0)),
        compiler_params=pltpu.CompilerParams(
            dimension_semantics=("parallel",)),           # megacore on v7x
    )(state, w1, b1_2d, w2, b2_2d)

    return out[:B, :A]


def init_params(key, state_size, hidden_size, action_size, dtype=jnp.float32):
    """Deterministic init mimicking nn.Linear's U(-1/sqrt(fan_in), 1/sqrt(fan_in))."""
    k1, k2, k3, k4 = jax.random.split(key, 4)
    bound1 = 1.0 / jnp.sqrt(jnp.float32(state_size))
    bound2 = 1.0 / jnp.sqrt(jnp.float32(hidden_size))
    w1 = jax.random.uniform(k1, (state_size, hidden_size), dtype,
                            minval=-bound1, maxval=bound1)
    b1 = jax.random.uniform(k2, (hidden_size,), dtype,
                            minval=-bound1, maxval=bound1)
    w2 = jax.random.uniform(k3, (hidden_size, action_size), dtype,
                            minval=-bound2, maxval=bound2)
    b2 = jax.random.uniform(k4, (action_size,), dtype,
                            minval=-bound2, maxval=bound2)
    return w1, b1, w2, b2


def _reference(state, w1, b1, w2, b2):
    return jnp.maximum(state @ w1 + b1, 0.0) @ w2 + b2


if __name__ == "__main__":
    # Small shapes consistent with the module: batch=2, state=16, hidden=32, actions=4.
    B, S, H, A = 2, 16, 32, 4
    key = jax.random.PRNGKey(0)
    k_x, k_p, k_big = jax.random.split(key, 3)
    state = jax.random.normal(k_x, (B, S), dtype=jnp.float32)
    w1, b1, w2, b2 = init_params(k_p, S, H, A)

    # 1) f32 path (exact match to the PyTorch semantics).
    out = value_network_forward(state, w1, b1, w2, b2)
    out = jax.block_until_ready(out)
    ref = _reference(state, w1, b1, w2, b2)
    assert out.shape == (B, A)
    assert jnp.allclose(out, ref, atol=1e-5, rtol=1e-5)

    # 2) Exercise the batch-tiled path (grid > 1, ragged batch padded to TB).
    B_big = 300
    state_big = jax.random.normal(k_big, (B_big, S), dtype=jnp.float32)
    out_big = value_network_forward(state_big, w1, b1, w2, b2, block_b=128)
    out_big = jax.block_until_ready(out_big)
    ref_big = _reference(state_big, w1, b1, w2, b2)
    assert out_big.shape == (B_big, A)
    assert jnp.allclose(out_big, ref_big, atol=1e-5, rtol=1e-5)

    # 3) bf16 MXU-operand path (f32 accumulate/epilogue) -- looser tolerance.
    out_bf16 = value_network_forward(state_big, w1, b1, w2, b2,
                                     block_b=128, matmul_dtype=jnp.bfloat16)
    out_bf16 = jax.block_until_ready(out_bf16)
    assert jnp.allclose(out_bf16, ref_big, atol=5e-2, rtol=5e-2)

    print("KERNEL_OK")
</pallas_src>

<mosaic_0001>
module attributes {stable_mosaic.version = 11 : i64} {
  func.func @value_network_kernel(%arg0: i32, %arg1: memref<2x16xf32, #tpu.memory_space<vmem>>, %arg2: memref<16x32xf32, #tpu.memory_space<vmem>>, %arg3: memref<1x32xf32, #tpu.memory_space<vmem>>, %arg4: memref<32x128xf32, #tpu.memory_space<vmem>>, %arg5: memref<1x128xf32, #tpu.memory_space<vmem>>, %arg6: memref<2x128xf32, #tpu.memory_space<vmem>>) attributes {dimension_semantics = [#tpu.dimension_semantics<parallel>], iteration_bounds = array<i64: 1>, scalar_prefetch = 0 : i64, scratch_operands = 0 : i64, tpu.core_type = #tpu.core_type<tc>, window_params = [{transform_indices = @transform_0, window_bounds = array<i64: 2, 16>}, {pipeline_mode = #tpu.pipeline_mode<synchronous>, transform_indices = @transform_1, window_bounds = array<i64: 16, 32>}, {pipeline_mode = #tpu.pipeline_mode<synchronous>, transform_indices = @transform_2, window_bounds = array<i64: 1, 32>}, {pipeline_mode = #tpu.pipeline_mode<synchronous>, transform_indices = @transform_3, window_bounds = array<i64: 32, 128>}, {pipeline_mode = #tpu.pipeline_mode<synchronous>, transform_indices = @transform_4, window_bounds = array<i64: 1, 128>}, {transform_indices = @transform_5, window_bounds = array<i64: 2, 128>}]} {
    %c0 = arith.constant 0 : index
    %c0_0 = arith.constant 0 : index
    %0 = vector.load %arg2[%c0, %c0_0] : memref<16x32xf32, #tpu.memory_space<vmem>>, vector<16x32xf32>
    %c0_1 = arith.constant 0 : index
    %c0_2 = arith.constant 0 : index
    %1 = vector.load %arg4[%c0_1, %c0_2] : memref<32x128xf32, #tpu.memory_space<vmem>>, vector<32x128xf32>
    %c0_3 = arith.constant 0 : index
    %c0_4 = arith.constant 0 : index
    %2 = vector.load %arg1[%c0_3, %c0_4] : memref<2x16xf32, #tpu.memory_space<vmem>>, vector<2x16xf32>
    %cst = arith.constant dense<0.000000e+00> : vector<2x32xf32>
    %3 = tpu.matmul %2, %0, %cst {dimension_numbers = #tpu.dot_dimension_numbers<[1], [0], [0], [1], [0, 0, 1, 1], [], []>} : vector<2x16xf32>, vector<16x32xf32>, vector<2x32xf32> -> vector<2x32xf32>
    %c0_5 = arith.constant 0 : index
    %c0_6 = arith.constant 0 : index
    %4 = vector.load %arg3[%c0_5, %c0_6] : memref<1x32xf32, #tpu.memory_space<vmem>>, vector<1x32xf32>
    %5 = vector.broadcast %4 : vector<1x32xf32> to vector<2x32xf32>
    %6 = arith.addf %3, %5 : vector<2x32xf32>
    %cst_7 = arith.constant 0.000000e+00 : f32
    %7 = vector.broadcast %cst_7 : f32 to vector<2x32xf32>
    %8 = arith.maximumf %6, %7 : vector<2x32xf32>
    %cst_8 = arith.constant dense<0.000000e+00> : vector<2x128xf32>
    %9 = tpu.matmul %8, %1, %cst_8 {dimension_numbers = #tpu.dot_dimension_numbers<[1], [0], [0], [1], [0, 0, 1, 1], [], []>} : vector<2x32xf32>, vector<32x128xf32>, vector<2x128xf32> -> vector<2x128xf32>
    %c0_9 = arith.constant 0 : index
    %c0_10 = arith.constant 0 : index
    %10 = vector.load %arg5[%c0_9, %c0_10] : memref<1x128xf32, #tpu.memory_space<vmem>>, vector<1x128xf32>
    %11 = vector.broadcast %10 : vector<1x128xf32> to vector<2x128xf32>
    %12 = arith.addf %9, %11 : vector<2x128xf32>
    %c0_11 = arith.constant 0 : index
    %c0_12 = arith.constant 0 : index
    %13 = vector.load %arg6[%c0_11, %c0_12] : memref<2x128xf32, #tpu.memory_space<vmem>>, vector<2x128xf32>
    tpu.vector_store %arg6[%c0_11, %c0_12], %12 {strides = array<i32>} : memref<2x128xf32, #tpu.memory_space<vmem>>, vector<2x128xf32>,
    return
  }
  func.func @transform_0(%arg0: i32) -> (i32, i32) {
    %c0_i32 = arith.constant 0 : i32
    %c0_i32_0 = arith.constant 0 : i32
    return %arg0, %c0_i32 : i32, i32
  }
  func.func @transform_1(%arg0: i32) -> (i32, i32) {
    %c0_i32 = arith.constant 0 : i32
    %c0_i32_0 = arith.constant 0 : i32
    %c0_i32_1 = arith.constant 0 : i32
    return %c0_i32, %c0_i32_0 : i32, i32
  }
  func.func @transform_2(%arg0: i32) -> (i32, i32) {
    %c0_i32 = arith.constant 0 : i32
    %c0_i32_0 = arith.constant 0 : i32
    %c0_i32_1 = arith.constant 0 : i32
    return %c0_i32, %c0_i32_0 : i32, i32
  }
  func.func @transform_3(%arg0: i32) -> (i32, i32) {
    %c0_i32 = arith.constant 0 : i32
    %c0_i32_0 = arith.constant 0 : i32
    %c0_i32_1 = arith.constant 0 : i32
    return %c0_i32, %c0_i32_0 : i32, i32
  }
  func.func @transform_4(%arg0: i32) -> (i32, i32) {
    %c0_i32 = arith.constant 0 : i32
    %c0_i32_0 = arith.constant 0 : i32
    %c0_i32_1 = arith.constant 0 : i32
    return %c0_i32, %c0_i32_0 : i32, i32
  }
  func.func @transform_5(%arg0: i32) -> (i32, i32) {
    %c0_i32 = arith.constant 0 : i32
    %c0_i32_0 = arith.constant 0 : i32
    return %arg0, %c0_i32 : i32, i32
  }
}

</mosaic_0001>

<llo_original>
// kernel: tpu_custom_call.1
$region0: #{tpu_custom_call.1}
  #allocation0 [shape = 'u32[]', space=smem, size = 0x4, offset = 0x4, fixed_abs, tag = 'smem constant byte address 0x4 - core index']
  #allocation1 [shape = 'u32[72,128]{1,0:T(1,128)}', space=vmem, size = 0x9000, scoped, tag = 'internal scratch']
  %s0 = inlined_call_operand.hbm [shape: f32[2,16], index: 0, kind: input, shape index: {}]
  %s1 = inlined_call_operand.hbm [shape: f32[16,32], index: 1, kind: input, shape index: {}]
  %s2 = inlined_call_operand.vmem [shape: f32[1,32], index: 2, kind: input, shape index: {}]
  %s3 = inlined_call_operand.hbm [shape: f32[32,128], index: 3, kind: input, shape index: {}]
  %s4 = inlined_call_operand.vmem [shape: f32[1,128], index: 4, kind: input, shape index: {}]
  %s5 = inlined_call_operand.hbm [shape: f32[2,128], index: 5, kind: output, shape index: {}]
  %s6 = sld [smem:[#allocation0]]
  $region42: #{tpu_custom_call.1} parent=0
    _
  %s8 = ssub.s32 1, %s6
  %s9 = scalar_select 0, %s8, %s6
  $region1: #{tpu_custom_call.1} parent=0
    #allocation2 [shape = 'u8[1024]{0}', space=vmem, size = 0x400, scoped, tag = 'input window, operand 0, single buffered']
    #allocation3 [shape = 's32[1]{0}', space=sflag, size = 0x4, scoped, tag = 'scoped memory for tpu_custom_call.1']
    #allocation4 [shape = 's32[1]{0}', space=sflag, size = 0x4, scoped, tag = 'scoped memory for tpu_custom_call.1']
    #allocation5 [shape = 'u8[8192]{0}', space=vmem, size = 0x2000, scoped, tag = 'input window, operand 1, single buffered']
    #allocation6 [shape = 's32[1]{0}', space=sflag, size = 0x4, scoped, tag = 'scoped memory for tpu_custom_call.1']
    #allocation7 [shape = 'u8[16384]{0}', space=vmem, size = 0x4000, scoped, tag = 'input window, operand 3, single buffered']
    #allocation8 [shape = 'u8[1024]{0}', space=vmem, size = 0x400, scoped, tag = 'output window, operand 0, single buffered']
    %10 = vsyncpa [#allocation3], 0
    %11 = vsyncpa [#allocation6], 0
    %12 = vsyncpa [#allocation4], 0
    // Predicated region
    $region2: #{tpu_custom_call.1} parent=1 // pred_check
      _
    $region3: #{tpu_custom_call.1} parent=1 // pred_check_branch
      %14 = sbr.rel (0) target = $region5
    $region4: #{tpu_custom_call.1} parent=1 // pred_region
      %16 = vsyncadd [#allocation3], 0
      %s18 = sshll.u32 %s0, 4
      %s19 = int_to_ptr.hbm [resolvable:$true] %s18
      %s20 = sshll.u32 [#allocation2], 4
      %s21 = int_to_ptr.vmem [resolvable:$true] %s20
      %23 = dma.hbm_to_vmem [thread:$0]  %s19, 32, %s21, [#allocation3]
    $region5: #{tpu_custom_call.1} parent=1 // pred_fallthru
      _
    // Predicated region
    $region6: #{tpu_custom_call.1} parent=1 // pred_check
      _
    $region7: #{tpu_custom_call.1} parent=1 // pred_check_branch
      %25 = sbr.rel (0) target = $region9
    $region8: #{tpu_custom_call.1} parent=1 // pred_region
      %27 = vsyncadd [#allocation6], 0
      %s28 = sshll.u32 %s1, 4
      %s29 = int_to_ptr.hbm [resolvable:$true] %s28
      %s30 = sshll.u32 [#allocation5], 4
      %s31 = int_to_ptr.vmem [resolvable:$true] %s30
      %36 = dma.hbm_to_vmem [thread:$0]  %s29, 256, %s31, [#allocation6], 128, 128, 8
    $region9: #{tpu_custom_call.1} parent=1 // pred_fallthru
      _
    // Predicated region
    $region10: #{tpu_custom_call.1} parent=1 // pred_check
      _
    $region11: #{tpu_custom_call.1} parent=1 // pred_check_branch
      %38 = sbr.rel (0) target = $region13
    $region12: #{tpu_custom_call.1} parent=1 // pred_region
      _
    $region13: #{tpu_custom_call.1} parent=1 // pred_fallthru
      _
    // Predicated region
    $region14: #{tpu_custom_call.1} parent=1 // pred_check
      _
    $region15: #{tpu_custom_call.1} parent=1 // pred_check_branch
      %40 = sbr.rel (0) target = $region17
    $region16: #{tpu_custom_call.1} parent=1 // pred_region
      %42 = vsyncadd [#allocation6], 0
      %s43 = sshll.u32 %s3, 4
      %s44 = int_to_ptr.hbm [resolvable:$true] %s43
      %s45 = sshll.u32 [#allocation7], 4
      %s46 = int_to_ptr.vmem [resolvable:$true] %s45
      %51 = dma.hbm_to_vmem [thread:$0]  %s44, 512, %s46, [#allocation6], 128, 128, 8
    $region17: #{tpu_custom_call.1} parent=1 // pred_fallthru
      _
    // Predicated region
    $region18: #{tpu_custom_call.1} parent=1 // pred_check
      _
    $region19: #{tpu_custom_call.1} parent=1 // pred_check_branch
      %53 = sbr.rel (0) target = $region21
    $region20: #{tpu_custom_call.1} parent=1 // pred_region
      _
    $region21: #{tpu_custom_call.1} parent=1 // pred_fallthru
      _
    // Predicated region
    $region22: #{tpu_custom_call.1} parent=1 // pred_check
      _
    $region23: #{tpu_custom_call.1} parent=1 // pred_check_branch
      %55 = sbr.rel (0) target = $region25
    $region24: #{tpu_custom_call.1} parent=1 // pred_region
      %57 = dma.done [#allocation3], 32
    $region25: #{tpu_custom_call.1} parent=1 // pred_fallthru
      _
    // Predicated region
    $region26: #{tpu_custom_call.1} parent=1 // pred_check
      _
    $region27: #{tpu_custom_call.1} parent=1 // pred_check_branch
      %59 = sbr.rel (0) target = $region29
    $region28: #{tpu_custom_call.1} parent=1 // pred_region
      %61 = dma.done [#allocation6], 256
    $region29: #{tpu_custom_call.1} parent=1 // pred_fallthru
      _
    // Predicated region
    $region30: #{tpu_custom_call.1} parent=1 // pred_check
      _
    $region31: #{tpu_custom_call.1} parent=1 // pred_check_branch
      %63 = sbr.rel (0) target = $region33
    $region32: #{tpu_custom_call.1} parent=1 // pred_region
      %65 = dma.done [#allocation6], 512
    $region33: #{tpu_custom_call.1} parent=1 // pred_fallthru
      _
    %v66 = vld [vmem:[#allocation5] sm:$0xff]
    %v67 = vld [vmem:[#allocation5 + $0x8] sm:$0xff]
    %v68 = vld [vmem:[#allocation7] sm:$0xff]
    %v69 = vld [vmem:[#allocation7 + $0x8] sm:$0xff]
    %v70 = vld [vmem:[#allocation7 + $0x10] sm:$0xff]
    %v71 = vld [vmem:[#allocation7 + $0x18] sm:$0xff]
    %v72 = vld [vmem:[#allocation2] sm:$0x3]
    %v73 = vld [vmem:[%s2] sm:$0x1]
    %v75 = vperm.slane %v73, 0
    %vm77 = vcmask 130048
    %v79 = vsel %vm77, %v72, 0
    %81 = vmatpush.msra.mxu0 0.0
    %82 = vmatpush.msra.mxu0 0.0
    %83 = vmatpush.msra.mxu0 0.0
    %84 = vmatpush.msra.mxu0 0.0
    %85 = vmatpush.msra.mxu0 0.0
    %86 = vmatpush.msra.mxu0 0.0
    %87 = vmatpush.msra.mxu0 0.0
    %88 = vmatpush.msra.mxu0 0.0
    %89 = vmatpush.msra.mxu0 0.0
    %90 = vmatpush.msra.mxu0 0.0
    %91 = vmatpush.msra.mxu0 0.0
    %92 = vmatpush.msra.mxu0 0.0
    %93 = vmatpush.msra.mxu0 0.0
    %94 = vmatpush.msra.mxu0 0.0
    %95 = vmatpush.msra.mxu0 %v67
    %96 = vmatpush.msra.mxu0 %v66
    %97 = vmatmul.f32.gmra.mxu0 %v79
    %v98 = vpop.f32.mrf.mxu0
    %v99 = vadd.f32 %v75, %v98
    %100 = vdwg.mxu0
    %v101 = vmax.f32 %v99, 0.0
    %v102 = vld [vmem:[%s4] sm:$0x1]
    %v104 = vperm.slane %v102, 0
    %vm106 = vcmask 261120
    %v108 = vsel %vm106, %v101, 0
    %110 = vmatpush.msra.mxu0 0.0
    %111 = vmatpush.msra.mxu0 0.0
    %112 = vmatpush.msra.mxu0 0.0
    %113 = vmatpush.msra.mxu0 0.0
    %114 = vmatpush.msra.mxu0 0.0
    %115 = vmatpush.msra.mxu0 0.0
    %116 = vmatpush.msra.mxu0 0.0
    %117 = vmatpush.msra.mxu0 0.0
    %118 = vmatpush.msra.mxu0 0.0
    %119 = vmatpush.msra.mxu0 0.0
    %120 = vmatpush.msra.mxu0 0.0
    %121 = vmatpush.msra.mxu0 0.0
    %122 = vmatpush.msra.mxu0 %v71
    %123 = vmatpush.msra.mxu0 %v70
    %124 = vmatpush.msra.mxu0 %v69
    %125 = vmatpush.msra.mxu0 %v68
    %126 = vmatmul.f32.gmra.mxu0 %v108
    %v127 = vpop.f32.mrf.mxu0
    %v128 = vadd.f32 %v104, %v127
    %129 = vdwg.mxu0
    %130 = vst [vmem:[#allocation8] sm:$0x3] %v128
    // Predicated region
    $region34: #{tpu_custom_call.1} parent=1 // pred_check
      _
    $region35: #{tpu_custom_call.1} parent=1 // pred_check_branch
      %132 = sbr.rel (0) target = $region37
    $region36: #{tpu_custom_call.1} parent=1 // pred_region
      %134 = vsyncadd [#allocation4], 0
      %s136 = sshll.u32 [#allocation8], 4
      %s137 = int_to_ptr.vmem [resolvable:$true] %s136
      %s138 = sshll.u32 %s5, 4
      %s139 = int_to_ptr.hbm [resolvable:$true] %s138
      %141 = dma.vmem_to_hbm [thread:$0]  %s137, 32, %s139, [#allocation4]
    $region37: #{tpu_custom_call.1} parent=1 // pred_fallthru
      _
    // Predicated region
    $region38: #{tpu_custom_call.1} parent=1 // pred_check
      _
    $region39: #{tpu_custom_call.1} parent=1 // pred_check_branch
      %143 = sbr.rel (0) target = $region41
    $region40: #{tpu_custom_call.1} parent=1 // pred_region
      %145 = dma.done [#allocation4], 32
    $region41: #{tpu_custom_call.1} parent=1 // pred_fallthru
      _
    %146 = vsyncpa [#allocation3], 1
    %147 = vsyncpa [#allocation6], 1
    %148 = vsyncpa [#allocation4], 1

</llo_original>
